<compile_context>
chip_gen: v7x
topology: tpu7x:2x2x1
jax: 0.10.0
libtpu: 0.0.40
codegen_flags: <defaults>
</compile_context>

<pallas_src>
import jax
import jax.numpy as jnp
from jax.experimental import pallas as pl
from jax.experimental.pallas import tpu as pltpu

EPS = 1e-8  # python float -> folded into the jaxpr, never a captured array


def _make_kernel(t_true):
    """Kernel factory; t_true is a static Python int (trace-time)."""
    inv_t = 1.0 / float(t_true)  # plain python float (no captured jnp constant)

    def kernel(x_ref, wm_ref, ws_ref, w1_ref, b1_ref, w2_ref, b2_ref, o_ref):
        x = x_ref[...]                                            # (TB, D, T) native dtype
        xf = x if x.dtype == jnp.float32 else x.astype(jnp.float32)

        # ---- single sweep over the tile: sum and sum-of-squares over time --
        sum_x = jnp.sum(xf, axis=2)                               # (TB, D)
        sum_x2 = jnp.sum(xf * xf, axis=2)                         # (TB, D)

        avg = sum_x * inv_t
        aavg = jnp.dot(avg, wm_ref[...],
                       preferred_element_type=jnp.float32)        # adaptive shift

        # E[(x - aavg)^2] = E[x^2] - 2*aavg*avg + aavg^2, clamped at 0 before sqrt
        var = sum_x2 * inv_t - (2.0 * avg - aavg) * aavg
        var = jnp.maximum(var, 0.0)
        std = jnp.sqrt(var + EPS)
        astd = jnp.dot(std, ws_ref[...],
                       preferred_element_type=jnp.float32)        # adaptive scale
        astd = jnp.where(astd <= EPS, 1.0, astd)

        # ---- gate: third time-reduction done algebraically on (TB, D) stats
        inv_astd = 1.0 / astd
        avg2 = (avg - aavg) * inv_astd          # == mean_T((x - aavg) / astd)
        h = jnp.dot(avg2, w1_ref[...],
                    preferred_element_type=jnp.float32) + b1_ref[...]
        g = jnp.dot(h, w2_ref[...],
                    preferred_element_type=jnp.float32) + b2_ref[...]
        gate = jax.nn.sigmoid(g)                                  # (TB, D)

        # ---- single fused affine output pass: o = x*s + t -------------------
        s = gate * inv_astd
        t = -aavg * s
        if x.dtype == jnp.bfloat16:
            # bf16 VALU exists on v6e/v7x: keep the widest pass in bf16.
            sb = s.astype(jnp.bfloat16)
            tb_ = t.astype(jnp.bfloat16)
            o_ref[...] = (x * sb[:, :, None] + tb_[:, :, None]).astype(o_ref.dtype)
        else:
            o_ref[...] = (xf * s[:, :, None] + t[:, :, None]).astype(o_ref.dtype)

    return kernel


def _vmem_capacity_bytes():
    """Per-generation VMEM size; falls back to the smallest (v7x, 64 MiB/TC)."""
    try:
        info = pltpu.get_tpu_info()
        cap = getattr(info, "vmem_capacity_bytes", None)
        if cap:
            return int(min(int(cap), 128 << 20))
    except Exception:
        pass
    return 64 << 20


def _largest_divisor_leq(n, cap):
    cap = max(1, min(int(cap), int(n)))
    for d in range(cap, 0, -1):
        if n % d == 0:
            return d
    return 1


def moe_dain_forward(x, w_mean, w_scale, w1, b1, w2, b2, *, tb=None):
    """x: (B, D, T).  Weights follow the PyTorch nn.Linear convention (out, in)."""
    B, D, T = x.shape
    H = w1.shape[0]  # 4*D

    # Pre-transpose weights so the kernel computes y = x @ W.T directly.
    wm_t = w_mean.T          # (D, D)
    ws_t = w_scale.T         # (D, D)
    w1_t = w1.T              # (D, H)
    w2_t = w2.T              # (H, D)
    b1_2d = b1.reshape(1, H)
    b2_2d = b2.reshape(1, D)

    in_item = x.dtype.itemsize
    weight_bytes = sum(int(a.size) * a.dtype.itemsize
                       for a in (wm_t, ws_t, w1_t, b1_2d, w2_t, b2_2d))

    # VMEM scoped limit: ~3/4 of physical capacity (headroom on 64 MiB v7x).
    vmem_cap = _vmem_capacity_bytes()
    vmem_limit = int(min(max(32 << 20, (vmem_cap * 3) // 4), 100 << 20))

    # Batch-tile size.  Per-row VMEM footprint uses lane/sublane-padded dims
    # (minor dim pads to 128 lanes, second-minor to the dtype sublane tile):
    # 2x double-buffered input + 2x double-buffered output + ~3 f32 temps.
    if tb is None:
        sub = max(8, 32 // max(in_item, 1))
        d_pad = int(pl.cdiv(D, sub) * sub)
        t_lane = int(pl.cdiv(T, 128) * 128)
        per_row = d_pad * t_lane * (2 * in_item + 2 * in_item + 3 * 4)
        budget = max(1 << 20, vmem_limit - 2 * weight_bytes - (8 << 20))
        cap = max(1, budget // per_row)
        if B >= 2:
            # keep >=2 grid steps: feeds both v7x TensorCores and gives the
            # pipeline something to overlap; per-step overhead is ~0.35 us.
            cap = min(cap, int(pl.cdiv(B, 2)))
        tb = _largest_divisor_leq(B, cap)   # divides B -> no batch padding
    tb = int(max(1, min(int(tb), B)))

    # Fallback only for an explicitly supplied non-dividing tb.
    pad_b = (-B) % tb
    x_in = jnp.pad(x, ((0, pad_b), (0, 0), (0, 0))) if pad_b else x
    B_used = B + pad_b
    nb = B_used // tb

    kernel = _make_kernel(T)

    act_spec = pl.BlockSpec((tb, D, T), lambda b: (b, 0, 0))
    const2 = lambda shape: pl.BlockSpec(shape, lambda b: (0, 0))

    cost = pl.CostEstimate(
        flops=int(20 * B * D * D + 5 * B * D * T),
        transcendentals=int(2 * B * D),
        bytes_accessed=int(2 * B * D * T * in_item + weight_bytes),
    )

    out = pl.pallas_call(
        kernel,
        out_shape=jax.ShapeDtypeStruct((B_used, D, T), x.dtype),
        grid=(nb,),
        in_specs=[
            act_spec,            # x tile (double-buffered across the grid)
            const2((D, D)),      # W_mean^T   (VMEM-resident across the grid)
            const2((D, D)),      # W_scale^T
            const2((D, H)),      # W1^T
            const2((1, H)),      # b1
            const2((H, D)),      # W2^T
            const2((1, D)),      # b2
        ],
        out_specs=pl.BlockSpec((tb, D, T), lambda b: (b, 0, 0)),
        compiler_params=pltpu.CompilerParams(
            dimension_semantics=("parallel",),
            vmem_limit_bytes=int(vmem_limit),
        ),
        cost_estimate=cost,
    )(x_in, wm_t, ws_t, w1_t, b1_2d, w2_t, b2_2d)

    if pad_b:
        out = out[:B]
    return out


def reference_forward(x, w_mean, w_scale, w1, b1, w2, b2):
    """Plain-JAX replica of the PyTorch forward, for correctness checking."""
    avg = jnp.mean(x, axis=2)
    adaptive_avg = avg @ w_mean.T
    x = x - adaptive_avg[:, :, None]
    std = jnp.sqrt(jnp.mean(x ** 2, axis=2) + EPS)
    adaptive_std = std @ w_scale.T
    adaptive_std = jnp.where(adaptive_std <= EPS, 1.0, adaptive_std)
    x = x / adaptive_std[:, :, None]
    avg2 = jnp.mean(x, axis=2)
    gate = jax.nn.sigmoid((avg2 @ w1.T + b1) @ w2.T + b2)
    return x * gate[:, :, None]


if __name__ == "__main__":
    key = jax.random.PRNGKey(0)

    def make_params(D, H, k):
        k1, kb1, k2, kb2 = jax.random.split(k, 4)
        # mean_layer / scaling_layer initialized to identity (as in __init__).
        w_mean = jnp.eye(D, dtype=jnp.float32)
        w_scale = jnp.eye(D, dtype=jnp.float32)
        bound1 = 1.0 / jnp.sqrt(jnp.float32(D))
        bound2 = 1.0 / jnp.sqrt(jnp.float32(H))
        w1 = jax.random.uniform(k1, (H, D), minval=-bound1, maxval=bound1, dtype=jnp.float32)
        b1 = jax.random.uniform(kb1, (H,), minval=-bound1, maxval=bound1, dtype=jnp.float32)
        w2 = jax.random.uniform(k2, (D, H), minval=-bound2, maxval=bound2, dtype=jnp.float32)
        b2 = jax.random.uniform(kb2, (D,), minval=-bound2, maxval=bound2, dtype=jnp.float32)
        return w_mean, w_scale, w1, b1, w2, b2

    kx, kp, kx2, kp2 = jax.random.split(key, 4)

    # --- primary small-shape check: (B, D, T) = (2, 32, 8) -------------------
    B, D, T = 2, 32, 8
    H = 4 * D
    x = jax.random.normal(kx, (B, D, T), dtype=jnp.float32)
    params = make_params(D, H, kp)

    out = jax.block_until_ready(moe_dain_forward(x, *params))
    ref = reference_forward(x, *params)
    assert out.shape == (B, D, T)
    assert jnp.allclose(out, ref, atol=1e-4, rtol=1e-4), "mismatch vs reference (primary)"

    # --- secondary check: T not a lane multiple + explicit non-dividing tb ---
    B2, D2, T2 = 3, 16, 200
    H2 = 4 * D2
    x2 = jax.random.normal(kx2, (B2, D2, T2), dtype=jnp.float32)
    params2 = make_params(D2, H2, kp2)

    out2 = jax.block_until_ready(moe_dain_forward(x2, *params2, tb=2))  # batch padded 3 -> 4
    ref2 = reference_forward(x2, *params2)
    assert out2.shape == (B2, D2, T2)
    assert jnp.allclose(out2, ref2, atol=1e-4, rtol=1e-4), "mismatch vs reference (padded batch path)"

    print("KERNEL_OK")
</pallas_src>

<mosaic_0001>
module attributes {stable_mosaic.version = 11 : i64} {
  func.func @kernel(%arg0: i32, %arg1: memref<1x32x8xf32, #tpu.memory_space<vmem>>, %arg2: memref<32x32xf32, #tpu.memory_space<vmem>>, %arg3: memref<32x32xf32, #tpu.memory_space<vmem>>, %arg4: memref<32x128xf32, #tpu.memory_space<vmem>>, %arg5: memref<1x128xf32, #tpu.memory_space<vmem>>, %arg6: memref<128x32xf32, #tpu.memory_space<vmem>>, %arg7: memref<1x32xf32, #tpu.memory_space<vmem>>, %arg8: memref<1x32x8xf32, #tpu.memory_space<vmem>>) attributes {dimension_semantics = [#tpu.dimension_semantics<parallel>], iteration_bounds = array<i64: 2>, scalar_prefetch = 0 : i64, scratch_operands = 0 : i64, tpu.core_type = #tpu.core_type<tc>, window_params = [{transform_indices = @transform_0, window_bounds = array<i64: 1, 32, 8>}, {pipeline_mode = #tpu.pipeline_mode<synchronous>, transform_indices = @transform_1, window_bounds = array<i64: 32, 32>}, {pipeline_mode = #tpu.pipeline_mode<synchronous>, transform_indices = @transform_2, window_bounds = array<i64: 32, 32>}, {pipeline_mode = #tpu.pipeline_mode<synchronous>, transform_indices = @transform_3, window_bounds = array<i64: 32, 128>}, {pipeline_mode = #tpu.pipeline_mode<synchronous>, transform_indices = @transform_4, window_bounds = array<i64: 1, 128>}, {pipeline_mode = #tpu.pipeline_mode<synchronous>, transform_indices = @transform_5, window_bounds = array<i64: 128, 32>}, {pipeline_mode = #tpu.pipeline_mode<synchronous>, transform_indices = @transform_6, window_bounds = array<i64: 1, 32>}, {transform_indices = @transform_7, window_bounds = array<i64: 1, 32, 8>}]} {
    %c0 = arith.constant 0 : index
    %c0_0 = arith.constant 0 : index
    %c0_1 = arith.constant 0 : index
    %0 = vector.load %arg1[%c0, %c0_0, %c0_1] : memref<1x32x8xf32, #tpu.memory_space<vmem>>, vector<1x32x8xf32>
    %cst = arith.constant dense<0.000000e+00> : vector<1x32xf32>
    %1 = vector.multi_reduction <add>, %0, %cst [2] : vector<1x32x8xf32> to vector<1x32xf32>
    %2 = arith.mulf %0, %0 : vector<1x32x8xf32>
    %cst_2 = arith.constant dense<0.000000e+00> : vector<1x32xf32>
    %3 = vector.multi_reduction <add>, %2, %cst_2 [2] : vector<1x32x8xf32> to vector<1x32xf32>
    %cst_3 = arith.constant 1.250000e-01 : f32
    %4 = vector.broadcast %cst_3 : f32 to vector<1x32xf32>
    %5 = arith.mulf %1, %4 : vector<1x32xf32>
    %c0_4 = arith.constant 0 : index
    %c0_5 = arith.constant 0 : index
    %6 = vector.load %arg2[%c0_4, %c0_5] : memref<32x32xf32, #tpu.memory_space<vmem>>, vector<32x32xf32>
    %cst_6 = arith.constant dense<0.000000e+00> : vector<1x32xf32>
    %7 = tpu.matmul %5, %6, %cst_6 {dimension_numbers = #tpu.dot_dimension_numbers<[1], [0], [0], [1], [0, 0, 1, 1], [], []>} : vector<1x32xf32>, vector<32x32xf32>, vector<1x32xf32> -> vector<1x32xf32>
    %cst_7 = arith.constant 1.250000e-01 : f32
    %8 = vector.broadcast %cst_7 : f32 to vector<1x32xf32>
    %9 = arith.mulf %3, %8 : vector<1x32xf32>
    %cst_8 = arith.constant 2.000000e+00 : f32
    %10 = vector.broadcast %cst_8 : f32 to vector<1x32xf32>
    %11 = arith.mulf %10, %5 : vector<1x32xf32>
    %12 = arith.subf %11, %7 : vector<1x32xf32>
    %13 = arith.mulf %12, %7 : vector<1x32xf32>
    %14 = arith.subf %9, %13 : vector<1x32xf32>
    %cst_9 = arith.constant 0.000000e+00 : f32
    %15 = vector.broadcast %cst_9 : f32 to vector<1x32xf32>
    %16 = arith.maximumf %14, %15 : vector<1x32xf32>
    %cst_10 = arith.constant 9.99999993E-9 : f32
    %17 = vector.broadcast %cst_10 : f32 to vector<1x32xf32>
    %18 = arith.addf %16, %17 : vector<1x32xf32>
    %19 = math.sqrt %18 : vector<1x32xf32>
    %c0_11 = arith.constant 0 : index
    %c0_12 = arith.constant 0 : index
    %20 = vector.load %arg3[%c0_11, %c0_12] : memref<32x32xf32, #tpu.memory_space<vmem>>, vector<32x32xf32>
    %cst_13 = arith.constant dense<0.000000e+00> : vector<1x32xf32>
    %21 = tpu.matmul %19, %20, %cst_13 {dimension_numbers = #tpu.dot_dimension_numbers<[1], [0], [0], [1], [0, 0, 1, 1], [], []>} : vector<1x32xf32>, vector<32x32xf32>, vector<1x32xf32> -> vector<1x32xf32>
    %cst_14 = arith.constant 9.99999993E-9 : f32
    %22 = vector.broadcast %cst_14 : f32 to vector<1x32xf32>
    %23 = arith.cmpf ole, %21, %22 : vector<1x32xf32>
    %cst_15 = arith.constant 1.000000e+00 : f32
    %24 = vector.broadcast %cst_15 : f32 to vector<1x32xf32>
    %25 = arith.select %23, %24, %21 : vector<1x32xi1>, vector<1x32xf32>
    %cst_16 = arith.constant 1.000000e+00 : f32
    %26 = vector.broadcast %cst_16 : f32 to vector<1x32xf32>
    %27 = arith.divf %26, %25 : vector<1x32xf32>
    %28 = arith.subf %5, %7 : vector<1x32xf32>
    %29 = arith.mulf %28, %27 : vector<1x32xf32>
    %c0_17 = arith.constant 0 : index
    %c0_18 = arith.constant 0 : index
    %30 = vector.load %arg4[%c0_17, %c0_18] : memref<32x128xf32, #tpu.memory_space<vmem>>, vector<32x128xf32>
    %cst_19 = arith.constant dense<0.000000e+00> : vector<1x128xf32>
    %31 = tpu.matmul %29, %30, %cst_19 {dimension_numbers = #tpu.dot_dimension_numbers<[1], [0], [0], [1], [0, 0, 1, 1], [], []>} : vector<1x32xf32>, vector<32x128xf32>, vector<1x128xf32> -> vector<1x128xf32>
    %c0_20 = arith.constant 0 : index
    %c0_21 = arith.constant 0 : index
    %32 = vector.load %arg5[%c0_20, %c0_21] : memref<1x128xf32, #tpu.memory_space<vmem>>, vector<1x128xf32>
    %33 = arith.addf %31, %32 : vector<1x128xf32>
    %c0_22 = arith.constant 0 : index
    %c0_23 = arith.constant 0 : index
    %34 = vector.load %arg6[%c0_22, %c0_23] : memref<128x32xf32, #tpu.memory_space<vmem>>, vector<128x32xf32>
    %cst_24 = arith.constant dense<0.000000e+00> : vector<1x32xf32>
    %35 = tpu.matmul %33, %34, %cst_24 {dimension_numbers = #tpu.dot_dimension_numbers<[1], [0], [0], [1], [0, 0, 1, 1], [], []>} : vector<1x128xf32>, vector<128x32xf32>, vector<1x32xf32> -> vector<1x32xf32>
    %c0_25 = arith.constant 0 : index
    %c0_26 = arith.constant 0 : index
    %36 = vector.load %arg7[%c0_25, %c0_26] : memref<1x32xf32, #tpu.memory_space<vmem>>, vector<1x32xf32>
    %37 = arith.addf %35, %36 : vector<1x32xf32>
    %38 = arith.negf %37 : vector<1x32xf32>
    %39 = math.exp %38 : vector<1x32xf32>
    %cst_27 = arith.constant 1.000000e+00 : f32
    %40 = vector.broadcast %cst_27 : f32 to vector<1x32xf32>
    %41 = arith.addf %40, %39 : vector<1x32xf32>
    %42 = arith.divf %40, %41 : vector<1x32xf32>
    %43 = arith.mulf %42, %27 : vector<1x32xf32>
    %cst_28 = arith.constant 0.000000e+00 : f32
    %44 = vector.broadcast %cst_28 : f32 to vector<1x32xf32>
    %45 = arith.subf %44, %7 : vector<1x32xf32>
    %46 = arith.mulf %45, %43 : vector<1x32xf32>
    %47 = vector.shape_cast %43 : vector<1x32xf32> to vector<1x32x1xf32>
    %48 = vector.broadcast %47 : vector<1x32x1xf32> to vector<1x32x8xf32>
    %49 = arith.mulf %0, %48 : vector<1x32x8xf32>
    %50 = vector.shape_cast %46 : vector<1x32xf32> to vector<1x32x1xf32>
    %51 = vector.broadcast %50 : vector<1x32x1xf32> to vector<1x32x8xf32>
    %52 = arith.addf %49, %51 : vector<1x32x8xf32>
    %c0_29 = arith.constant 0 : index
    %c0_30 = arith.constant 0 : index
    %c0_31 = arith.constant 0 : index
    %53 = vector.load %arg8[%c0_29, %c0_30, %c0_31] : memref<1x32x8xf32, #tpu.memory_space<vmem>>, vector<1x32x8xf32>
    tpu.vector_store %arg8[%c0_29, %c0_30, %c0_31], %52 {strides = array<i32>} : memref<1x32x8xf32, #tpu.memory_space<vmem>>, vector<1x32x8xf32>,
    return
  }
  func.func @transform_0(%arg0: i32) -> (i32, i32, i32) {
    %c0_i32 = arith.constant 0 : i32
    %c0_i32_0 = arith.constant 0 : i32
    %c0_i32_1 = arith.constant 0 : i32
    return %arg0, %c0_i32, %c0_i32_0 : i32, i32, i32
  }
  func.func @transform_1(%arg0: i32) -> (i32, i32) {
    %c0_i32 = arith.constant 0 : i32
    %c0_i32_0 = arith.constant 0 : i32
    %c0_i32_1 = arith.constant 0 : i32
    return %c0_i32, %c0_i32_0 : i32, i32
  }
  func.func @transform_2(%arg0: i32) -> (i32, i32) {
    %c0_i32 = arith.constant 0 : i32
    %c0_i32_0 = arith.constant 0 : i32
    %c0_i32_1 = arith.constant 0 : i32
    return %c0_i32, %c0_i32_0 : i32, i32
  }
  func.func @transform_3(%arg0: i32) -> (i32, i32) {
    %c0_i32 = arith.constant 0 : i32
    %c0_i32_0 = arith.constant 0 : i32
    %c0_i32_1 = arith.constant 0 : i32
    return %c0_i32, %c0_i32_0 : i32, i32
  }
  func.func @transform_4(%arg0: i32) -> (i32, i32) {
    %c0_i32 = arith.constant 0 : i32
    %c0_i32_0 = arith.constant 0 : i32
    %c0_i32_1 = arith.constant 0 : i32
    return %c0_i32, %c0_i32_0 : i32, i32
  }
  func.func @transform_5(%arg0: i32) -> (i32, i32) {
    %c0_i32 = arith.constant 0 : i32
    %c0_i32_0 = arith.constant 0 : i32
    %c0_i32_1 = arith.constant 0 : i32
    return %c0_i32, %c0_i32_0 : i32, i32
  }
  func.func @transform_6(%arg0: i32) -> (i32, i32) {
    %c0_i32 = arith.constant 0 : i32
    %c0_i32_0 = arith.constant 0 : i32
    %c0_i32_1 = arith.constant 0 : i32
    return %c0_i32, %c0_i32_0 : i32, i32
  }
  func.func @transform_7(%arg0: i32) -> (i32, i32, i32) {
    %c0_i32 = arith.constant 0 : i32
    %c0_i32_0 = arith.constant 0 : i32
    %c0_i32_1 = arith.constant 0 : i32
    return %arg0, %c0_i32, %c0_i32_0 : i32, i32, i32
  }
}

</mosaic_0001>

<llo_original>
// kernel: tpu_custom_call.1
$region0: #{tpu_custom_call.1}
  #allocation0 [shape = 'u32[]', space=smem, size = 0x4, offset = 0x4, fixed_abs, tag = 'smem constant byte address 0x4 - core index']
  #allocation1 [shape = 'u32[144,128]{1,0:T(1,128)}', space=vmem, size = 0x12000, scoped, tag = 'internal scratch']
  %s0 = inlined_call_operand.vmem [shape: f32[2,32,8], index: 0, kind: input, shape index: {}]
  %s1 = inlined_call_operand.vmem [shape: f32[32,32], index: 1, kind: input, shape index: {}]
  %s2 = inlined_call_operand.vmem [shape: f32[32,32], index: 2, kind: input, shape index: {}]
  %s3 = inlined_call_operand.vmem [shape: f32[32,128], index: 3, kind: input, shape index: {}]
  %s4 = inlined_call_operand.vmem [shape: f32[1,128], index: 4, kind: input, shape index: {}]
  %s5 = inlined_call_operand.vmem [shape: f32[128,32], index: 5, kind: input, shape index: {}]
  %s6 = inlined_call_operand.vmem [shape: f32[1,32], index: 6, kind: input, shape index: {}]
  %s7 = inlined_call_operand.vmem [shape: f32[2,32,8], index: 7, kind: output, shape index: {}]
  %s8 = sld [smem:[#allocation0]]
  $region61: #{tpu_custom_call.1} parent=0
    _
  %s10 = ssub.s32 1, %s8
  %s11 = scalar_select 0, %s10, %s8
  loop: start=0, step=1, limit=4
  $region2: #{tpu_custom_call.1} parent=0 // loop_pre_header
    _
  $region3: #{tpu_custom_call.1} parent=0 // loop_header
    %s13 = sphi 0, %s17
    %p14 = scmp.ge.s32.totalorder %s13, 4
    %s23 = sphi 0, %s25
    %s26 = sphi 0, %s23
    %s27 = sphi 0, %s26
    %s43 = sphi 0, %s27
    %s47 = sphi 0, %s47
    %s49 = sphi 0, %s47
    %s50 = sphi 0, %s49
    %s64 = sphi 0, %s50
    %s68 = sphi 0, %s68
    %s70 = sphi 0, %s68
    %s71 = sphi 0, %s70
    %s85 = sphi 0, %s71
    %s89 = sphi 0, %s89
    %s91 = sphi 0, %s89
    %s92 = sphi 0, %s91
    %s106 = sphi 0, %s92
    %s110 = sphi 0, %s110
    %s112 = sphi 0, %s110
    %s113 = sphi 0, %s112
    %s127 = sphi 0, %s113
    %s131 = sphi 0, %s131
    %s133 = sphi 0, %s131
    %s134 = sphi 0, %s133
    %s148 = sphi 0, %s134
    %s152 = sphi 0, %s152
    %s154 = sphi 0, %s152
    %s155 = sphi 0, %s154
    %s169 = sphi 0, %s155
    %s175 = sphi 0, %s177
    %s178 = sphi 0, %s175
    %s179 = sphi 0, %s178
    %s195 = sphi 0, %s179
  $region4: #{tpu_custom_call.1} parent=0 // loop_header_branch
    %16 = sbr.rel (%p14) target = $region8
  $region5: #{tpu_custom_call.1} parent=0 // loop_body
    %s18 = ssub.s32 %s13, 1
    %s19 = ssub.s32 %s13, 2
    %s20 = sadd.s32 %s13, 1
    %s21 = ssub.s32 %s13, %s20
    %p22 = scmp.eq.s32.totalorder %s21, 0
    %s24 = sadd.s32 %s23, 1
    %s25 = scalar_select %p22, %s23, %s24
    %p28 = pneg %p22
    %p29 = scmp.eq.s32.totalorder %s13, 1
    %p30 = por %p28, %p29
    %p31 = scmp.ne.s32.totalorder %s23, %s26
    %p32 = scmp.eq.s32.totalorder %s13, 0
    %p33 = por %p31, %p32
    %p34 = scmp.ne.s32.totalorder %s23, %s26
    %p35 = scmp.eq.s32.totalorder %s18, 1
    %p36 = por %p34, %p35
    %p37 = scmp.ne.s32.totalorder %s26, %s27
    %p38 = scmp.eq.s32.totalorder %s18, 0
    %p39 = por %p37, %p38
    %p40 = scmp.ne.s32.totalorder %s26, %s27
    %p41 = scmp.eq.s32.totalorder %s19, 1
    %p42 = por %p40, %p41
    %p44 = scmp.ne.s32.totalorder %s27, %s43
    %p45 = scmp.eq.s32.totalorder %s19, 0
    %p46 = por %p44, %p45
    %s48 = sadd.s32 %s47, 1
    %p51 = scmp.eq.s32.totalorder %s13, 1
    %p52 = scmp.ne.s32.totalorder %s47, %s49
    %p53 = scmp.eq.s32.totalorder %s13, 0
    %p54 = por %p52, %p53
    %p55 = scmp.ne.s32.totalorder %s47, %s49
    %p56 = scmp.eq.s32.totalorder %s18, 1
    %p57 = por %p55, %p56
    %p58 = scmp.ne.s32.totalorder %s49, %s50
    %p59 = scmp.eq.s32.totalorder %s18, 0
    %p60 = por %p58, %p59
    %p61 = scmp.ne.s32.totalorder %s49, %s50
    %p62 = scmp.eq.s32.totalorder %s19, 1
    %p63 = por %p61, %p62
    %p65 = scmp.ne.s32.totalorder %s50, %s64
    %p66 = scmp.eq.s32.totalorder %s19, 0
    %p67 = por %p65, %p66
    %s69 = sadd.s32 %s68, 1
    %p72 = scmp.eq.s32.totalorder %s13, 1
    %p73 = scmp.ne.s32.totalorder %s68, %s70
    %p74 = scmp.eq.s32.totalorder %s13, 0
    %p75 = por %p73, %p74
    %p76 = scmp.ne.s32.totalorder %s68, %s70
    %p77 = scmp.eq.s32.totalorder %s18, 1
    %p78 = por %p76, %p77
    %p79 = scmp.ne.s32.totalorder %s70, %s71
    %p80 = scmp.eq.s32.totalorder %s18, 0
    %p81 = por %p79, %p80
    %p82 = scmp.ne.s32.totalorder %s70, %s71
    %p83 = scmp.eq.s32.totalorder %s19, 1
    %p84 = por %p82, %p83
    %p86 = scmp.ne.s32.totalorder %s71, %s85
    %p87 = scmp.eq.s32.totalorder %s19, 0
    %p88 = por %p86, %p87
    %s90 = sadd.s32 %s89, 1
    %p93 = scmp.eq.s32.totalorder %s13, 1
    %p94 = scmp.ne.s32.totalorder %s89, %s91
    %p95 = scmp.eq.s32.totalorder %s13, 0
    %p96 = por %p94, %p95
    %p97 = scmp.ne.s32.totalorder %s89, %s91
    %p98 = scmp.eq.s32.totalorder %s18, 1
    %p99 = por %p97, %p98
    %p100 = scmp.ne.s32.totalorder %s91, %s92
    %p101 = scmp.eq.s32.totalorder %s18, 0
    %p102 = por %p100, %p101
    %p103 = scmp.ne.s32.totalorder %s91, %s92
    %p104 = scmp.eq.s32.totalorder %s19, 1
    %p105 = por %p103, %p104
    %p107 = scmp.ne.s32.totalorder %s92, %s106
    %p108 = scmp.eq.s32.totalorder %s19, 0
    %p109 = por %p107, %p108
    %s111 = sadd.s32 %s110, 1
    %p114 = scmp.eq.s32.totalorder %s13, 1
    %p115 = scmp.ne.s32.totalorder %s110, %s112
    %p116 = scmp.eq.s32.totalorder %s13, 0
    %p117 = por %p115, %p116
    %p118 = scmp.ne.s32.totalorder %s110, %s112
    %p119 = scmp.eq.s32.totalorder %s18, 1
    %p120 = por %p118, %p119
    %p121 = scmp.ne.s32.totalorder %s112, %s113
    %p122 = scmp.eq.s32.totalorder %s18, 0
    %p123 = por %p121, %p122
    %p124 = scmp.ne.s32.totalorder %s112, %s113
    %p125 = scmp.eq.s32.totalorder %s19, 1
    %p126 = por %p124, %p125
    %p128 = scmp.ne.s32.totalorder %s113, %s127
    %p129 = scmp.eq.s32.totalorder %s19, 0
    %p130 = por %p128, %p129
    %s132 = sadd.s32 %s131, 1
    %p135 = scmp.eq.s32.totalorder %s13, 1
    %p136 = scmp.ne.s32.totalorder %s131, %s133
    %p137 = scmp.eq.s32.totalorder %s13, 0
    %p138 = por %p136, %p137
    %p139 = scmp.ne.s32.totalorder %s131, %s133
    %p140 = scmp.eq.s32.totalorder %s18, 1
    %p141 = por %p139, %p140
    %p142 = scmp.ne.s32.totalorder %s133, %s134
    %p143 = scmp.eq.s32.totalorder %s18, 0
    %p144 = por %p142, %p143
    %p145 = scmp.ne.s32.totalorder %s133, %s134
    %p146 = scmp.eq.s32.totalorder %s19, 1
    %p147 = por %p145, %p146
    %p149 = scmp.ne.s32.totalorder %s134, %s148
    %p150 = scmp.eq.s32.totalorder %s19, 0
    %p151 = por %p149, %p150
    %s153 = sadd.s32 %s152, 1
    %p156 = scmp.eq.s32.totalorder %s13, 1
    %p157 = scmp.ne.s32.totalorder %s152, %s154
    %p158 = scmp.eq.s32.totalorder %s13, 0
    %p159 = por %p157, %p158
    %p160 = scmp.ne.s32.totalorder %s152, %s154
    %p161 = scmp.eq.s32.totalorder %s18, 1
    %p162 = por %p160, %p161
    %p163 = scmp.ne.s32.totalorder %s154, %s155
    %p164 = scmp.eq.s32.totalorder %s18, 0
    %p165 = por %p163, %p164
    %p166 = scmp.ne.s32.totalorder %s154, %s155
    %p167 = scmp.eq.s32.totalorder %s19, 1
    %p168 = por %p166, %p167
    %p170 = scmp.ne.s32.totalorder %s155, %s169
    %p171 = scmp.eq.s32.totalorder %s19, 0
    %p172 = por %p170, %p171
    %s173 = ssub.s32 %s13, %s20
    %p174 = scmp.eq.s32.totalorder %s173, 0
    %s176 = sadd.s32 %s175, 1
    %s177 = scalar_select %p174, %s175, %s176
    %p180 = pneg %p174
    %p181 = scmp.eq.s32.totalorder %s13, 1
    %p182 = por %p180, %p181
    %p183 = scmp.ne.s32.totalorder %s175, %s178
    %p184 = scmp.eq.s32.totalorder %s13, 0
    %p185 = por %p183, %p184
    %p186 = scmp.ne.s32.totalorder %s175, %s178
    %p187 = scmp.eq.s32.totalorder %s18, 1
    %p188 = por %p186, %p187
    %p189 = scmp.ne.s32.totalorder %s178, %s179
    %p190 = scmp.eq.s32.totalorder %s18, 0
    %p191 = por %p189, %p190
    %p192 = scmp.ne.s32.totalorder %s178, %s179
    %p193 = scmp.eq.s32.totalorder %s19, 1
    %p194 = por %p192, %p193
    %p196 = scmp.ne.s32.totalorder %s179, %s195
    %p197 = scmp.eq.s32.totalorder %s19, 0
    %p198 = por %p196, %p197
    %p199 = scmp.le.s32.totalorder 1, %s13
    %p200 = scmp.lt.s32.totalorder %s13, 3
    %p201 = pnand %p199, %p200
    %p202 = pneg %p201
    // Predicated region
    $region9: #{tpu_custom_call.1} parent=5 // pred_check
      _
    $region10: #{tpu_custom_call.1} parent=5 // pred_check_branch
      %204 = sbr.rel (%p201) target = $region12
    $region11: #{tpu_custom_call.1} parent=5 // pred_region
      %s205 = ssub.s32 %s13, 1
      // Predicated region
      $region13: #{tpu_custom_call.1} parent=11 // pred_check
        %p206 = pneg %p60
      $region14: #{tpu_custom_call.1} parent=11 // pred_check_branch
        %208 = sbr.rel (%p206) target = $region16
      $region15: #{tpu_custom_call.1} parent=11 // pred_region
        _
      $region16: #{tpu_custom_call.1} parent=11 // pred_fallthru
        _
      // Predicated region
      $region17: #{tpu_custom_call.1} parent=11 // pred_check
        %p209 = pneg %p81
      $region18: #{tpu_custom_call.1} parent=11 // pred_check_branch
        %211 = sbr.rel (%p209) target = $region20
      $region19: #{tpu_custom_call.1} parent=11 // pred_region
        _
      $region20: #{tpu_custom_call.1} parent=11 // pred_fallthru
        _
      // Predicated region
      $region21: #{tpu_custom_call.1} parent=11 // pred_check
        %p212 = pneg %p102
      $region22: #{tpu_custom_call.1} parent=11 // pred_check_branch
        %214 = sbr.rel (%p212) target = $region24
      $region23: #{tpu_custom_call.1} parent=11 // pred_region
        _
      $region24: #{tpu_custom_call.1} parent=11 // pred_fallthru
        _
      // Predicated region
      $region25: #{tpu_custom_call.1} parent=11 // pred_check
        %p215 = pneg %p123
      $region26: #{tpu_custom_call.1} parent=11 // pred_check_branch
        %217 = sbr.rel (%p215) target = $region28
      $region27: #{tpu_custom_call.1} parent=11 // pred_region
        _
      $region28: #{tpu_custom_call.1} parent=11 // pred_fallthru
        _
      // Predicated region
      $region29: #{tpu_custom_call.1} parent=11 // pred_check
        %p218 = pneg %p144
      $region30: #{tpu_custom_call.1} parent=11 // pred_check_branch
        %220 = sbr.rel (%p218) target = $region32
      $region31: #{tpu_custom_call.1} parent=11 // pred_region
        _
      $region32: #{tpu_custom_call.1} parent=11 // pred_fallthru
        _
      // Predicated region
      $region33: #{tpu_custom_call.1} parent=11 // pred_check
        %p221 = pneg %p165
      $region34: #{tpu_custom_call.1} parent=11 // pred_check_branch
        %223 = sbr.rel (%p221) target = $region36
      $region35: #{tpu_custom_call.1} parent=11 // pred_region
        _
      $region36: #{tpu_custom_call.1} parent=11 // pred_fallthru
        _
    $region12: #{tpu_custom_call.1} parent=5 // pred_fallthru
      _
    %p224 = scmp.lt.s32.totalorder %s13, 2
    // Predicated region
    $region37: #{tpu_custom_call.1} parent=5 // pred_check
      %p225 = pneg %p224
    $region38: #{tpu_custom_call.1} parent=5 // pred_check_branch
      %227 = sbr.rel (%p225) target = $region40
    $region39: #{tpu_custom_call.1} parent=5 // pred_region
      // Predicated region
      $region41: #{tpu_custom_call.1} parent=39 // pred_check
        %p228 = pneg %p33
      $region42: #{tpu_custom_call.1} parent=39 // pred_check_branch
        %230 = sbr.rel (%p228) target = $region44
      $region43: #{tpu_custom_call.1} parent=39 // pred_region
        %p231 = scmp.lt.s32.totalorder %s13, 1
        %s232 = scalar_select %p231, %s13, 1
        %s233 = smul.addr %s232, 4
        %s234 = smul.addr %s233, 8
        %s235 = scalar_lea.vmem %s0, %s234
      $region44: #{tpu_custom_call.1} parent=39 // pred_fallthru
        _
    $region40: #{tpu_custom_call.1} parent=5 // pred_fallthru
      _
    %p236 = scmp.le.s32.totalorder 1, %s13
    %p237 = scmp.lt.s32.totalorder %s13, 3
    %p238 = pnand %p236, %p237
    %p239 = pneg %p238
    // Predicated region
    $region45: #{tpu_custom_call.1} parent=5 // pred_check
      _
    $region46: #{tpu_custom_call.1} parent=5 // pred_check_branch
      %241 = sbr.rel (%p238) target = $region48
    $region47: #{tpu_custom_call.1} parent=5 // pred_region
      %s242 = ssub.s32 %s13, 1
      %p243 = scmp.lt.s32.totalorder %s18, 1
      %s244 = scalar_select %p243, %s18, 1
      %s245 = smul.addr %s244, 4
      %s246 = smul.addr %s245, 8
      %s247 = scalar_lea.vmem %s0, %s246
      %p248 = pneg %p39
      %p249 = pneg %p36
      %p250 = pneg %p60
      %p251 = pneg %p57
      %p252 = pneg %p81
      %p253 = pneg %p78
      %p254 = pneg %p102
      %p255 = pneg %p99
      %p256 = pneg %p123
      %p257 = pneg %p120
      %p258 = pneg %p144
      %p259 = pneg %p141
      %p260 = pneg %p165
      %p261 = pneg %p162
      %p262 = pneg %p191
      %p263 = pneg %p188
      %p264 = scmp.lt.s32.totalorder %s18, 1
      %s265 = scalar_select %p264, %s18, 1
      %s266 = smul.addr %s265, 4
      %s267 = smul.addr %s266, 8
      %s268 = scalar_lea.vmem %s7, %s267
      %p269 = scmp.lt.s32.totalorder %s18, 1
      %s270 = scalar_select %p269, %s18, 1
      %s271 = smul.addr %s270, 4
      %s272 = smul.addr %s271, 8
      %s273 = scalar_lea.vmem %s0, %s272
      %p274 = scmp.lt.s32.totalorder %s18, 1
      %s275 = scalar_select %p274, %s18, 1
      %s276 = smul.addr %s275, 4
      %s277 = smul.addr %s276, 8
      %s278 = scalar_lea.vmem %s7, %s277
      %v279 = vld [vmem:[%s273] sm:$0xff]
      %v280 = vld [vmem:[%s273 + $0x8] sm:$0xff]
      %v281 = vld [vmem:[%s273 + $0x10] sm:$0xff]
      %v282 = vld [vmem:[%s273 + $0x18] sm:$0xff]
      %vm283 = vcmask 64512
      %v284 = vsel %vm283, %v279, 0.0
      %285 = vadd.xlane.f32.xlu0 %v284
      %v286 = vpop.xlane.xlu0 %285
      %v287 = vsel %vm283, %v280, 0.0
      %288 = vadd.xlane.f32.xlu0 %v287
      %v289 = vpop.xlane.xlu0 %288
      %v290 = vsel %vm283, %v281, 0.0
      %291 = vadd.xlane.f32.xlu0 %v290
      %v292 = vpop.xlane.xlu0 %291
      %v293 = vsel %vm283, %v282, 0.0
      %294 = vadd.xlane.f32.xlu0 %v293
      %v295 = vpop.xlane.xlu0 %294
      %v296 = vmul.f32 %v279, %v279
      %v297 = vmul.f32 %v280, %v280
      %v298 = vmul.f32 %v281, %v281
      %v299 = vmul.f32 %v282, %v282
      %v300 = vsel %vm283, %v296, 0.0
      %301 = vadd.xlane.f32.xlu0 %v300
      %v302 = vpop.xlane.xlu0 %301
      %v303 = vsel %vm283, %v297, 0.0
      %304 = vadd.xlane.f32.xlu0 %v303
      %v305 = vpop.xlane.xlu0 %304
      %v306 = vsel %vm283, %v298, 0.0
      %307 = vadd.xlane.f32.xlu0 %v306
      %v308 = vpop.xlane.xlu0 %307
      %v309 = vsel %vm283, %v299, 0.0
      %310 = vadd.xlane.f32.xlu0 %v309
      %v311 = vpop.xlane.xlu0 %310
      %v312 = vmul.f32 %v286, 0.125
      %v313 = vmul.f32 %v289, 0.125
      %v314 = vmul.f32 %v292, 0.125
      %v315 = vmul.f32 %v295, 0.125
      %v316 = vld [vmem:[%s1] sm:$0xff]
      %v317 = vld [vmem:[%s1 + $0x8] sm:$0xff]
      %v318 = vld [vmem:[%s1 + $0x10] sm:$0xff]
      %v319 = vld [vmem:[%s1 + $0x18] sm:$0xff]
      %v324 = vlaneseq
      %v325 = vand.u32 %v324, 127
      %v326 = vlaneseq
      %v327 = vshrl.u32 %v326, 7
      %v328 = vsub.s32 %v325, %v327
      %v329 = vrot.slane %v312, %v328
      %v330 = vadd.s32 %v325, 4294967288
      %v331 = vlaneseq
      %v332 = vshrl.u32 %v331, 7
      %v333 = vsub.s32 %v330, %v332
      %v334 = vrot.slane %v313, %v333
      %vm335 = vcmask 130112
      %v336 = vsel %vm335, %v334, %v329
      %v337 = vadd.s32 %v325, 4294967280
      %v338 = vlaneseq
      %v339 = vshrl.u32 %v338, 7
      %v340 = vsub.s32 %v337, %v339
      %v341 = vrot.slane %v314, %v340
      %vm342 = vcmask 195712
      %v343 = vsel %vm342, %v341, %v336
      %v344 = vadd.s32 %v325, 4294967272
      %v345 = vlaneseq
      %v346 = vshrl.u32 %v345, 7
      %v347 = vsub.s32 %v344, %v346
      %v348 = vrot.slane %v315, %v347
      %vm349 = vcmask 261312
      %v350 = vsel %vm349, %v348, %v343
      %vm351 = vcmask 261120
      %v352 = vsel %vm351, %v350, 0
      %354 = vmatprep.subr.mxu0 0.0
      %355 = vmatpush1.msra.mxu0 %v316
      %356 = vmatprep.subr.mxu0 0.0
      %357 = vmatpush1.msra.mxu0 %v317
      %358 = vmatprep.subr.mxu0 0.0
      %359 = vmatpush1.msra.mxu0 %v318
      %360 = vmatprep.subr.mxu0 0.0
      %361 = vmatpush1.msra.mxu0 %v319
      %362 = vmatprep.subr.mxu0 0.0
      %363 = vmatpush1.msra.mxu0 0.0
      %364 = vmatprep.subr.mxu0 0.0
      %365 = vmatpush1.msra.mxu0 0.0
      %366 = vmatprep.subr.mxu0 0.0
      %367 = vmatpush1.msra.mxu0 0.0
      %368 = vmatprep.subr.mxu0 0.0
      %369 = vmatpush1.msra.mxu0 0.0
      %370 = vmatprep.subr.mxu0 0.0
      %371 = vmatpush1.msra.mxu0 0.0
      %372 = vmatprep.subr.mxu0 0.0
      %373 = vmatpush1.msra.mxu0 0.0
      %374 = vmatprep.subr.mxu0 0.0
      %375 = vmatpush1.msra.mxu0 0.0
      %376 = vmatprep.subr.mxu0 0.0
      %377 = vmatpush1.msra.mxu0 0.0
      %378 = vmatprep.subr.mxu0 0.0
      %379 = vmatpush1.msra.mxu0 0.0
      %380 = vmatprep.subr.mxu0 0.0
      %381 = vmatpush1.msra.mxu0 0.0
      %382 = vmatprep.subr.mxu0 0.0
      %383 = vmatpush1.msra.mxu0 0.0
      %384 = vmatprep.subr.mxu0 0.0
      %385 = vmatpush1.msra.mxu0 0.0
      %386 = vmatprep.subr.mxu0 0.0
      %387 = vmatpush1.msra.mxu0 0.0
      %388 = vmatprep.subr.mxu0 0.0
      %389 = vmatpush1.msra.mxu0 0.0
      %390 = vmatprep.subr.mxu0 0.0
      %391 = vmatpush1.msra.mxu0 0.0
      %392 = vmatprep.subr.mxu0 0.0
      %393 = vmatpush1.msra.mxu0 0.0
      %394 = vmatprep.subr.mxu0 0.0
      %395 = vmatpush1.msra.mxu0 0.0
      %396 = vmatprep.subr.mxu0 0.0
      %397 = vmatpush1.msra.mxu0 0.0
      %398 = vmatprep.subr.mxu0 0.0
      %399 = vmatpush1.msra.mxu0 0.0
      %400 = vmatprep.subr.mxu0 0.0
      %401 = vmatpush1.msra.mxu0 0.0
      %402 = vmatprep.subr.mxu0 0.0
      %403 = vmatpush1.msra.mxu0 0.0
      %404 = vmatprep.subr.mxu0 0.0
      %405 = vmatpush1.msra.mxu0 0.0
      %406 = vmatprep.subr.mxu0 0.0
      %407 = vmatpush1.msra.mxu0 0.0
      %408 = vmatprep.subr.mxu0 0.0
      %409 = vmatpush1.msra.mxu0 0.0
      %410 = vmatprep.subr.mxu0 0.0
      %411 = vmatpush1.msra.mxu0 0.0
      %412 = vmatprep.subr.mxu0 0.0
      %413 = vmatpush1.msra.mxu0 0.0
      %414 = vmatprep.subr.mxu0 0.0
      %415 = vmatpush1.msra.mxu0 0.0
      %416 = vmatprep.subr.mxu0 0.0
      %417 = vmatpush1.msra.mxu0 0.0
      %418 = vmatprep.mubr.f32.mxu0 0.0
      %419 = vmatmul.mubr.f32.gmra.mrb[0].mxu0 %v352
      %v420 = vpop.f32.mrb[0].mxu0
      %v421 = vadd.f32 0.0, %v420
      %v422 = vpop.f32.mrb[0].mxu0
      %423 = vdwg.mxu0
      %v424 = vmul.f32 %v302, 0.125
      %v425 = vmul.f32 %v305, 0.125
      %v426 = vmul.f32 %v308, 0.125
      %v427 = vmul.f32 %v311, 0.125
      %v428 = vmul.f32 %v312, 2.0
      %v429 = vmul.f32 %v313, 2.0
      %v430 = vmul.f32 %v314, 2.0
      %v431 = vmul.f32 %v315, 2.0
      %v433 = vlaneseq
      %v434 = vshrl.u32 %v433, 7
      %v435 = vsub.s32 0, %v434
      %v436 = vrot.slane %v421, %v435
      %438 = vbcast.lane.b32.xlu0 %v436, 256
      %v439 = vpop.permute.xlu0 %438
      %s441 = sor.u32 256, 8
      %442 = vbcast.lane.b32.xlu0 %v436, %s441
      %v443 = vpop.permute.xlu0 %442
      %s445 = sor.u32 256, 16
      %446 = vbcast.lane.b32.xlu0 %v436, %s445
      %v447 = vpop.permute.xlu0 %446
      %s449 = sor.u32 256, 24
      %450 = vbcast.lane.b32.xlu0 %v436, %s449
      %v451 = vpop.permute.xlu0 %450
      %v456 = vsub.f32 %v428, %v439
      %v457 = vsub.f32 %v429, %v443
      %v458 = vsub.f32 %v430, %v447
      %v459 = vsub.f32 %v431, %v451
      %v460 = vmul.f32 %v456, %v439
      %v461 = vmul.f32 %v457, %v443
      %v462 = vmul.f32 %v458, %v447
      %v463 = vmul.f32 %v459, %v451
      %v464 = vsub.f32 %v424, %v460
      %v465 = vsub.f32 %v425, %v461
      %v466 = vsub.f32 %v426, %v462
      %v467 = vsub.f32 %v427, %v463
      %v468 = vmax.f32 %v464, 0.0
      %v469 = vmax.f32 %v465, 0.0
      %v470 = vmax.f32 %v466, 0.0
      %v471 = vmax.f32 %v467, 0.0
      %v472 = vadd.f32 %v468, 1e-08
      %v473 = vadd.f32 %v469, 1e-08
      %v474 = vadd.f32 %v470, 1e-08
      %v475 = vadd.f32 %v471, 1e-08
      %v476 = vrsqrt.pop %v472
      %v477 = vmul.f32 %v472, %v476
      %vm478 = vcmp.eq.f32.partialorder %v472, inf
      %v479 = vsel %vm478, %v472, %v477
      %vm480 = vcmp.eq.f32.partialorder %v472, 0.0
      %v481 = vand.u32 %v472, 2147483648
      %v482 = vsel %vm480, %v481, %v479
      %v483 = vrsqrt.pop %v473
      %v484 = vmul.f32 %v473, %v483
      %vm485 = vcmp.eq.f32.partialorder %v473, inf
      %v486 = vsel %vm485, %v473, %v484
      %vm487 = vcmp.eq.f32.partialorder %v473, 0.0
      %v488 = vand.u32 %v473, 2147483648
      %v489 = vsel %vm487, %v488, %v486
      %v490 = vrsqrt.pop %v474
      %v491 = vmul.f32 %v474, %v490
      %vm492 = vcmp.eq.f32.partialorder %v474, inf
      %v493 = vsel %vm492, %v474, %v491
      %vm494 = vcmp.eq.f32.partialorder %v474, 0.0
      %v495 = vand.u32 %v474, 2147483648
      %v496 = vsel %vm494, %v495, %v493
      %v497 = vrsqrt.pop %v475
      %v498 = vmul.f32 %v475, %v497
      %vm499 = vcmp.eq.f32.partialorder %v475, inf
      %v500 = vsel %vm499, %v475, %v498
      %vm501 = vcmp.eq.f32.partialorder %v475, 0.0
      %v502 = vand.u32 %v475, 2147483648
      %v503 = vsel %vm501, %v502, %v500
      %v504 = vld [vmem:[%s2] sm:$0xff]
      %v505 = vld [vmem:[%s2 + $0x8] sm:$0xff]
      %v506 = vld [vmem:[%s2 + $0x10] sm:$0xff]
      %v507 = vld [vmem:[%s2 + $0x18] sm:$0xff]
      %512 = vset.pattern.permute.xlu0 0
      %513 = vperm.xlu0 %512, %v482
      %v514 = vpop.permute.xlu0 %513
      %515 = vset.pattern.permute.xlu0 0
      %516 = vperm.xlu0 %515, %v489
      %v517 = vpop.permute.xlu0 %516
      %518 = vset.pattern.permute.xlu0 0
      %519 = vperm.xlu0 %518, %v496
      %v520 = vpop.permute.xlu0 %519
      %521 = vset.pattern.permute.xlu0 0
      %522 = vperm.xlu0 %521, %v503
      %v523 = vpop.permute.xlu0 %522
      %v524 = vlaneseq
      %v525 = vshrl.u32 %v524, 7
      %v526 = vsub.s32 %v325, %v525
      %v527 = vrot.slane %v514, %v526
      %v528 = vlaneseq
      %v529 = vshrl.u32 %v528, 7
      %v530 = vsub.s32 %v330, %v529
      %v531 = vrot.slane %v517, %v530
      %v532 = vsel %vm335, %v531, %v527
      %v533 = vlaneseq
      %v534 = vshrl.u32 %v533, 7
      %v535 = vsub.s32 %v337, %v534
      %v536 = vrot.slane %v520, %v535
      %v537 = vsel %vm342, %v536, %v532
      %v538 = vlaneseq
      %v539 = vshrl.u32 %v538, 7
      %v540 = vsub.s32 %v344, %v539
      %v541 = vrot.slane %v523, %v540
      %v542 = vsel %vm349, %v541, %v537
      %v543 = vsel %vm351, %v542, 0
      %545 = vmatprep.subr.mxu0 0.0
      %546 = vmatpush1.msra.mxu0 %v504
      %547 = vmatprep.subr.mxu0 0.0
      %548 = vmatpush1.msra.mxu0 %v505
      %549 = vmatprep.subr.mxu0 0.0
      %550 = vmatpush1.msra.mxu0 %v506
      %551 = vmatprep.subr.mxu0 0.0
      %552 = vmatpush1.msra.mxu0 %v507
      %553 = vmatprep.subr.mxu0 0.0
      %554 = vmatpush1.msra.mxu0 0.0
      %555 = vmatprep.subr.mxu0 0.0
      %556 = vmatpush1.msra.mxu0 0.0
      %557 = vmatprep.subr.mxu0 0.0
      %558 = vmatpush1.msra.mxu0 0.0
      %559 = vmatprep.subr.mxu0 0.0
      %560 = vmatpush1.msra.mxu0 0.0
      %561 = vmatprep.subr.mxu0 0.0
      %562 = vmatpush1.msra.mxu0 0.0
      %563 = vmatprep.subr.mxu0 0.0
      %564 = vmatpush1.msra.mxu0 0.0
      %565 = vmatprep.subr.mxu0 0.0
      %566 = vmatpush1.msra.mxu0 0.0
      %567 = vmatprep.subr.mxu0 0.0
      %568 = vmatpush1.msra.mxu0 0.0
      %569 = vmatprep.subr.mxu0 0.0
      %570 = vmatpush1.msra.mxu0 0.0
      %571 = vmatprep.subr.mxu0 0.0
      %572 = vmatpush1.msra.mxu0 0.0
      %573 = vmatprep.subr.mxu0 0.0
      %574 = vmatpush1.msra.mxu0 0.0
      %575 = vmatprep.subr.mxu0 0.0
      %576 = vmatpush1.msra.mxu0 0.0
      %577 = vmatprep.subr.mxu0 0.0
      %578 = vmatpush1.msra.mxu0 0.0
      %579 = vmatprep.subr.mxu0 0.0
      %580 = vmatpush1.msra.mxu0 0.0
      %581 = vmatprep.subr.mxu0 0.0
      %582 = vmatpush1.msra.mxu0 0.0
      %583 = vmatprep.subr.mxu0 0.0
      %584 = vmatpush1.msra.mxu0 0.0
      %585 = vmatprep.subr.mxu0 0.0
      %586 = vmatpush1.msra.mxu0 0.0
      %587 = vmatprep.subr.mxu0 0.0
      %588 = vmatpush1.msra.mxu0 0.0
      %589 = vmatprep.subr.mxu0 0.0
      %590 = vmatpush1.msra.mxu0 0.0
      %591 = vmatprep.subr.mxu0 0.0
      %592 = vmatpush1.msra.mxu0 0.0
      %593 = vmatprep.subr.mxu0 0.0
      %594 = vmatpush1.msra.mxu0 0.0
      %595 = vmatprep.subr.mxu0 0.0
      %596 = vmatpush1.msra.mxu0 0.0
      %597 = vmatprep.subr.mxu0 0.0
      %598 = vmatpush1.msra.mxu0 0.0
      %599 = vmatprep.subr.mxu0 0.0
      %600 = vmatpush1.msra.mxu0 0.0
      %601 = vmatprep.subr.mxu0 0.0
      %602 = vmatpush1.msra.mxu0 0.0
      %603 = vmatprep.subr.mxu0 0.0
      %604 = vmatpush1.msra.mxu0 0.0
      %605 = vmatprep.subr.mxu0 0.0
      %606 = vmatpush1.msra.mxu0 0.0
      %607 = vmatprep.subr.mxu0 0.0
      %608 = vmatpush1.msra.mxu0 0.0
      %609 = vmatprep.mubr.f32.mxu0 0.0
      %610 = vmatmul.mubr.f32.gmra.mrb[0].mxu0 %v543
      %v611 = vpop.f32.mrb[0].mxu0
      %v612 = vadd.f32 0.0, %v611
      %v613 = vpop.f32.mrb[0].mxu0
      %614 = vdwg.mxu0
      %vm615 = vcmp.le.f32.partialorder %v612, 1e-08
      %v616 = vsel %vm615, 1.0, %v612
      %v617 = vrcp.pop %v616
      %v618 = vmul.f32 1.0, %v617
      %v619 = vsub.f32 %v312, %v439
      %v620 = vsub.f32 %v313, %v443
      %v621 = vsub.f32 %v314, %v447
      %v622 = vsub.f32 %v315, %v451
      %v624 = vlaneseq
      %v625 = vshrl.u32 %v624, 7
      %v626 = vsub.s32 0, %v625
      %v627 = vrot.slane %v618, %v626
      %629 = vbcast.lane.b32.xlu0 %v627, 256
      %v630 = vpop.permute.xlu0 %629
      %s632 = sor.u32 256, 8
      %633 = vbcast.lane.b32.xlu0 %v627, %s632
      %v634 = vpop.permute.xlu0 %633
      %s636 = sor.u32 256, 16
      %637 = vbcast.lane.b32.xlu0 %v627, %s636
      %v638 = vpop.permute.xlu0 %637
      %s640 = sor.u32 256, 24
      %641 = vbcast.lane.b32.xlu0 %v627, %s640
      %v642 = vpop.permute.xlu0 %641
      %v647 = vmul.f32 %v619, %v630
      %v648 = vmul.f32 %v620, %v634
      %v649 = vmul.f32 %v621, %v638
      %v650 = vmul.f32 %v622, %v642
      %v651 = vld [vmem:[%s3] sm:$0xff]
      %v652 = vld [vmem:[%s3 + $0x8] sm:$0xff]
      %v653 = vld [vmem:[%s3 + $0x10] sm:$0xff]
      %v654 = vld [vmem:[%s3 + $0x18] sm:$0xff]
      %v655 = vld [vmem:[%s4] sm:$0x1]
      %660 = vset.pattern.permute.xlu0 0
      %661 = vperm.xlu0 %660, %v647
      %v662 = vpop.permute.xlu0 %661
      %663 = vset.pattern.permute.xlu0 0
      %664 = vperm.xlu0 %663, %v648
      %v665 = vpop.permute.xlu0 %664
      %666 = vset.pattern.permute.xlu0 0
      %667 = vperm.xlu0 %666, %v649
      %v668 = vpop.permute.xlu0 %667
      %669 = vset.pattern.permute.xlu0 0
      %670 = vperm.xlu0 %669, %v650
      %v671 = vpop.permute.xlu0 %670
      %v672 = vlaneseq
      %v673 = vshrl.u32 %v672, 7
      %v674 = vsub.s32 %v325, %v673
      %v675 = vrot.slane %v662, %v674
      %v676 = vlaneseq
      %v677 = vshrl.u32 %v676, 7
      %v678 = vsub.s32 %v330, %v677
      %v679 = vrot.slane %v665, %v678
      %v680 = vsel %vm335, %v679, %v675
      %v681 = vlaneseq
      %v682 = vshrl.u32 %v681, 7
      %v683 = vsub.s32 %v337, %v682
      %v684 = vrot.slane %v668, %v683
      %v685 = vsel %vm342, %v684, %v680
      %v686 = vlaneseq
      %v687 = vshrl.u32 %v686, 7
      %v688 = vsub.s32 %v344, %v687
      %v689 = vrot.slane %v671, %v688
      %v690 = vsel %vm349, %v689, %v685
      %v691 = vsel %vm351, %v690, 0
      %693 = vmatprep.subr.mxu0 0.0
      %694 = vmatpush1.msra.mxu0 %v651
      %695 = vmatprep.subr.mxu0 0.0
      %696 = vmatpush1.msra.mxu0 %v652
      %697 = vmatprep.subr.mxu0 0.0
      %698 = vmatpush1.msra.mxu0 %v653
      %699 = vmatprep.subr.mxu0 0.0
      %700 = vmatpush1.msra.mxu0 %v654
      %701 = vmatprep.subr.mxu0 0.0
      %702 = vmatpush1.msra.mxu0 0.0
      %703 = vmatprep.subr.mxu0 0.0
      %704 = vmatpush1.msra.mxu0 0.0
      %705 = vmatprep.subr.mxu0 0.0
      %706 = vmatpush1.msra.mxu0 0.0
      %707 = vmatprep.subr.mxu0 0.0
      %708 = vmatpush1.msra.mxu0 0.0
      %709 = vmatprep.subr.mxu0 0.0
      %710 = vmatpush1.msra.mxu0 0.0
      %711 = vmatprep.subr.mxu0 0.0
      %712 = vmatpush1.msra.mxu0 0.0
      %713 = vmatprep.subr.mxu0 0.0
      %714 = vmatpush1.msra.mxu0 0.0
      %715 = vmatprep.subr.mxu0 0.0
      %716 = vmatpush1.msra.mxu0 0.0
      %717 = vmatprep.subr.mxu0 0.0
      %718 = vmatpush1.msra.mxu0 0.0
      %719 = vmatprep.subr.mxu0 0.0
      %720 = vmatpush1.msra.mxu0 0.0
      %721 = vmatprep.subr.mxu0 0.0
      %722 = vmatpush1.msra.mxu0 0.0
      %723 = vmatprep.subr.mxu0 0.0
      %724 = vmatpush1.msra.mxu0 0.0
      %725 = vmatprep.subr.mxu0 0.0
      %726 = vmatpush1.msra.mxu0 0.0
      %727 = vmatprep.subr.mxu0 0.0
      %728 = vmatpush1.msra.mxu0 0.0
      %729 = vmatprep.subr.mxu0 0.0
      %730 = vmatpush1.msra.mxu0 0.0
      %731 = vmatprep.subr.mxu0 0.0
      %732 = vmatpush1.msra.mxu0 0.0
      %733 = vmatprep.subr.mxu0 0.0
      %734 = vmatpush1.msra.mxu0 0.0
      %735 = vmatprep.subr.mxu0 0.0
      %736 = vmatpush1.msra.mxu0 0.0
      %737 = vmatprep.subr.mxu0 0.0
      %738 = vmatpush1.msra.mxu0 0.0
      %739 = vmatprep.subr.mxu0 0.0
      %740 = vmatpush1.msra.mxu0 0.0
      %741 = vmatprep.subr.mxu0 0.0
      %742 = vmatpush1.msra.mxu0 0.0
      %743 = vmatprep.subr.mxu0 0.0
      %744 = vmatpush1.msra.mxu0 0.0
      %745 = vmatprep.subr.mxu0 0.0
      %746 = vmatpush1.msra.mxu0 0.0
      %747 = vmatprep.subr.mxu0 0.0
      %748 = vmatpush1.msra.mxu0 0.0
      %749 = vmatprep.subr.mxu0 0.0
      %750 = vmatpush1.msra.mxu0 0.0
      %751 = vmatprep.subr.mxu0 0.0
      %752 = vmatpush1.msra.mxu0 0.0
      %753 = vmatprep.subr.mxu0 0.0
      %754 = vmatpush1.msra.mxu0 0.0
      %755 = vmatprep.subr.mxu0 0.0
      %756 = vmatpush1.msra.mxu0 0.0
      %757 = vmatprep.mubr.f32.mxu0 0.0
      %758 = vmatmul.mubr.f32.gmra.mrb[0].mxu0 %v691
      %v759 = vpop.f32.mrb[0].mxu0
      %v760 = vadd.f32 %v655, %v759
      %v761 = vpop.f32.mrb[0].mxu0
      %762 = vdwg.mxu0
      %v763 = vld [vmem:[%s5] sm:$0xff]
      %v764 = vld [vmem:[%s5 + $0x8] sm:$0xff]
      %v765 = vld [vmem:[%s5 + $0x10] sm:$0xff]
      %v766 = vld [vmem:[%s5 + $0x18] sm:$0xff]
      %v767 = vld [vmem:[%s5 + $0x20] sm:$0xff]
      %v768 = vld [vmem:[%s5 + $0x28] sm:$0xff]
      %v769 = vld [vmem:[%s5 + $0x30] sm:$0xff]
      %v770 = vld [vmem:[%s5 + $0x38] sm:$0xff]
      %v771 = vld [vmem:[%s5 + $0x40] sm:$0xff]
      %v772 = vld [vmem:[%s5 + $0x48] sm:$0xff]
      %v773 = vld [vmem:[%s5 + $0x50] sm:$0xff]
      %v774 = vld [vmem:[%s5 + $0x58] sm:$0xff]
      %v775 = vld [vmem:[%s5 + $0x60] sm:$0xff]
      %v776 = vld [vmem:[%s5 + $0x68] sm:$0xff]
      %v777 = vld [vmem:[%s5 + $0x70] sm:$0xff]
      %v778 = vld [vmem:[%s5 + $0x78] sm:$0xff]
      %v779 = vld [vmem:[%s6] sm:$0x1]
      %780 = vmatprep.subr.mxu0 0.0
      %781 = vmatpush1.msra.mxu0 %v763
      %782 = vmatprep.subr.mxu0 0.0
      %783 = vmatpush1.msra.mxu0 %v764
      %784 = vmatprep.subr.mxu0 0.0
      %785 = vmatpush1.msra.mxu0 %v765
      %786 = vmatprep.subr.mxu0 0.0
      %787 = vmatpush1.msra.mxu0 %v766
      %788 = vmatprep.subr.mxu0 0.0
      %789 = vmatpush1.msra.mxu0 %v767
      %790 = vmatprep.subr.mxu0 0.0
      %791 = vmatpush1.msra.mxu0 %v768
      %792 = vmatprep.subr.mxu0 0.0
      %793 = vmatpush1.msra.mxu0 %v769
      %794 = vmatprep.subr.mxu0 0.0
      %795 = vmatpush1.msra.mxu0 %v770
      %796 = vmatprep.subr.mxu0 0.0
      %797 = vmatpush1.msra.mxu0 %v771
      %798 = vmatprep.subr.mxu0 0.0
      %799 = vmatpush1.msra.mxu0 %v772
      %800 = vmatprep.subr.mxu0 0.0
      %801 = vmatpush1.msra.mxu0 %v773
      %802 = vmatprep.subr.mxu0 0.0
      %803 = vmatpush1.msra.mxu0 %v774
      %804 = vmatprep.subr.mxu0 0.0
      %805 = vmatpush1.msra.mxu0 %v775
      %806 = vmatprep.subr.mxu0 0.0
      %807 = vmatpush1.msra.mxu0 %v776
      %808 = vmatprep.subr.mxu0 0.0
      %809 = vmatpush1.msra.mxu0 %v777
      %810 = vmatprep.subr.mxu0 0.0
      %811 = vmatpush1.msra.mxu0 %v778
      %812 = vmatprep.subr.mxu0 0.0
      %813 = vmatpush1.msra.mxu0 0.0
      %814 = vmatprep.subr.mxu0 0.0
      %815 = vmatpush1.msra.mxu0 0.0
      %816 = vmatprep.subr.mxu0 0.0
      %817 = vmatpush1.msra.mxu0 0.0
      %818 = vmatprep.subr.mxu0 0.0
      %819 = vmatpush1.msra.mxu0 0.0
      %820 = vmatprep.subr.mxu0 0.0
      %821 = vmatpush1.msra.mxu0 0.0
      %822 = vmatprep.subr.mxu0 0.0
      %823 = vmatpush1.msra.mxu0 0.0
      %824 = vmatprep.subr.mxu0 0.0
      %825 = vmatpush1.msra.mxu0 0.0
      %826 = vmatprep.subr.mxu0 0.0
      %827 = vmatpush1.msra.mxu0 0.0
      %828 = vmatprep.subr.mxu0 0.0
      %829 = vmatpush1.msra.mxu0 0.0
      %830 = vmatprep.subr.mxu0 0.0
      %831 = vmatpush1.msra.mxu0 0.0
      %832 = vmatprep.subr.mxu0 0.0
      %833 = vmatpush1.msra.mxu0 0.0
      %834 = vmatprep.subr.mxu0 0.0
      %835 = vmatpush1.msra.mxu0 0.0
      %836 = vmatprep.subr.mxu0 0.0
      %837 = vmatpush1.msra.mxu0 0.0
      %838 = vmatprep.subr.mxu0 0.0
      %839 = vmatpush1.msra.mxu0 0.0
      %840 = vmatprep.subr.mxu0 0.0
      %841 = vmatpush1.msra.mxu0 0.0
      %842 = vmatprep.subr.mxu0 0.0
      %843 = vmatpush1.msra.mxu0 0.0
      %844 = vmatprep.mubr.f32.mxu0 0.0
      %845 = vmatmul.mubr.f32.gmra.mrb[0].mxu0 %v760
      %v846 = vpop.f32.mrb[0].mxu0
      %v847 = vadd.f32 %v779, %v846
      %v848 = vpop.f32.mrb[0].mxu0
      %849 = vdwg.mxu0
      %v850 = vxor.u32 %v847, 2147483648
      %v851 = vmul.f32 %v850, 1.442695
      %v852 = vpow.pop %v851
      %v853 = vadd.f32 %v852, 1.0
      %v854 = vrcp.pop %v853
      %v855 = vmul.f32 1.0, %v854
      %v856 = vmul.f32 %v855, %v618
      %v857 = vsub.f32 0.0, %v421
      %v858 = vmul.f32 %v857, %v856
      %v859 = vlaneseq
      %v860 = vshrl.u32 %v859, 7
      %v861 = vsub.s32 0, %v860
      %v862 = vrot.slane %v856, %v861
      %864 = vbcast.lane.b32.xlu0 %v862, 256
      %v865 = vpop.permute.xlu0 %864
      %s867 = sor.u32 256, 8
      %868 = vbcast.lane.b32.xlu0 %v862, %s867
      %v869 = vpop.permute.xlu0 %868
      %s871 = sor.u32 256, 16
      %872 = vbcast.lane.b32.xlu0 %v862, %s871
      %v873 = vpop.permute.xlu0 %872
      %s875 = sor.u32 256, 24
      %876 = vbcast.lane.b32.xlu0 %v862, %s875
      %v877 = vpop.permute.xlu0 %876
      %v878 = vmul.f32 %v279, %v865
      %v879 = vmul.f32 %v280, %v869
      %v880 = vmul.f32 %v281, %v873
      %v881 = vmul.f32 %v282, %v877
      %v882 = vlaneseq
      %v883 = vshrl.u32 %v882, 7
      %v884 = vsub.s32 0, %v883
      %v885 = vrot.slane %v858, %v884
      %887 = vbcast.lane.b32.xlu0 %v885, 256
      %v888 = vpop.permute.xlu0 %887
      %s890 = sor.u32 256, 8
      %891 = vbcast.lane.b32.xlu0 %v885, %s890
      %v892 = vpop.permute.xlu0 %891
      %s894 = sor.u32 256, 16
      %895 = vbcast.lane.b32.xlu0 %v885, %s894
      %v896 = vpop.permute.xlu0 %895
      %s898 = sor.u32 256, 24
      %899 = vbcast.lane.b32.xlu0 %v885, %s898
      %v900 = vpop.permute.xlu0 %899
      %v901 = vadd.f32 %v878, %v888
      %v902 = vadd.f32 %v879, %v892
      %v903 = vadd.f32 %v880, %v896
      %v904 = vadd.f32 %v881, %v900
      %905 = vst.msk [vmem:[%s278] sm:$0xff] %vm283, %v901
      %906 = vst.msk [vmem:[%s278 + $0x8] sm:$0xff] %vm283, %v902
      %907 = vst.msk [vmem:[%s278 + $0x10] sm:$0xff] %vm283, %v903
      %908 = vst.msk [vmem:[%s278 + $0x18] sm:$0xff] %vm283, %v904
      %p909 = scmp.lt.s32.totalorder %s18, 1
      %s910 = scalar_select %p909, %s18, 1
      %s911 = smul.addr %s910, 4
      %s912 = smul.addr %s911, 8
      %s913 = scalar_lea.vmem %s7, %s912
      // Predicated region
      $region49: #{tpu_custom_call.1} parent=47 // pred_check
        %p914 = pneg %p188
      $region50: #{tpu_custom_call.1} parent=47 // pred_check_branch
        %916 = sbr.rel (%p914) target = $region52
      $region51: #{tpu_custom_call.1} parent=47 // pred_region
        _
      $region52: #{tpu_custom_call.1} parent=47 // pred_fallthru
        _
    $region48: #{tpu_custom_call.1} parent=5 // pred_fallthru
      _
    %p917 = scmp.le.s32.totalorder 2, %s13
    // Predicated region
    $region53: #{tpu_custom_call.1} parent=5 // pred_check
      %p918 = pneg %p917
    $region54: #{tpu_custom_call.1} parent=5 // pred_check_branch
      %920 = sbr.rel (%p918) target = $region56
    $region55: #{tpu_custom_call.1} parent=5 // pred_region
      %s921 = ssub.s32 %s13, 2
      // Predicated region
      $region57: #{tpu_custom_call.1} parent=55 // pred_check
        %p922 = pneg %p194
      $region58: #{tpu_custom_call.1} parent=55 // pred_check_branch
        %924 = sbr.rel (%p922) target = $region60
      $region59: #{tpu_custom_call.1} parent=55 // pred_region
        %p925 = scmp.lt.s32.totalorder %s19, 1
        %s926 = scalar_select %p925, %s19, 1
        %s927 = smul.addr %s926, 4
        %s928 = smul.addr %s927, 8
        %s929 = scalar_lea.vmem %s7, %s928
      $region60: #{tpu_custom_call.1} parent=55 // pred_fallthru
        _
    $region56: #{tpu_custom_call.1} parent=5 // pred_fallthru
      _
  $region6: #{tpu_custom_call.1} parent=0 // loop_footer
    %s17 = sadd.s32 1, %s13
  $region7: #{tpu_custom_call.1} parent=0 // loop_footer_branch
    %12 = sbr.rel target = $region3
  $region8: #{tpu_custom_call.1} parent=0 // loop_exit
    _

</llo_original>
